<compile_context>
chip_gen: v7x
topology: tpu7x:2x2x1
jax: 0.10.0
libtpu: 0.0.40
codegen_flags: <defaults>
</compile_context>

<pallas_src>
import functools

import numpy as np
import jax
import jax.numpy as jnp
from jax.experimental import pallas as pl
from jax.experimental.pallas import tpu as pltpu


# ----------------------------------------------------------------------------
# helpers
# ----------------------------------------------------------------------------
def _round_up(n, m):
    return ((n + m - 1) // m) * m


def _tile_and_pad(n, want):
    """Sublane-aligned tile (multiple of 8, <= want) + padded extent."""
    want = max(8, (int(want) // 8) * 8)
    tile = min(want, _round_up(int(n), 8))
    return tile, _round_up(int(n), tile)


def _lane_tile_and_pad(n, want):
    """Lane-aligned tile (multiple of 128, <= want) + padded extent."""
    want = max(128, (int(want) // 128) * 128)
    tile = min(want, _round_up(int(n), 128))
    return tile, _round_up(int(n), tile)


def _default_vmem_limit():
    # generation-aware scoped-VMEM budget: ~3/4 of physical, capped at 96 MiB
    # (v5e/v6e: 128 MiB physical -> 96 MiB; v7x: 64 MiB physical -> 48 MiB).
    try:
        cap = int(pltpu.get_tpu_info().vmem_capacity_bytes)
    except Exception:
        cap = 64 * 1024 * 1024
    return max(32 * 1024 * 1024, min(cap * 3 // 4, 96 * 1024 * 1024))


_VMEM_LIMIT = _default_vmem_limit()


# ----------------------------------------------------------------------------
# Kernel 1: per-node-type linear transform  y = x @ W^T + b   (row-tiled,
# lane-dense output: Cout padded to a multiple of 128 so stores are unmasked).
# ----------------------------------------------------------------------------
def _linear_kernel(x_ref, wt_ref, b_ref, o_ref):
    x = x_ref[...].astype(jnp.bfloat16)
    wt = wt_ref[...].astype(jnp.bfloat16)
    o_ref[...] = jnp.dot(x, wt, preferred_element_type=jnp.float32) + b_ref[...]


def linear(x, w, b, row_tile=256):
    # x: (R, Cin), w: (Cout, Cin), b: (Cout,)
    R, Cin = x.shape
    Cout = w.shape[0]
    Cpad = _round_up(Cout, 128)
    tm, Rpad = _tile_and_pad(R, row_tile)

    wt = jnp.zeros((Cin, Cpad), jnp.float32).at[:, :Cout].set(w.T)
    bp = jnp.zeros((1, Cpad), jnp.float32).at[:, :Cout].set(b)
    xp = x if Rpad == R else jnp.pad(x, ((0, Rpad - R), (0, 0)))

    out = pl.pallas_call(
        _linear_kernel,
        out_shape=jax.ShapeDtypeStruct((Rpad, Cpad), jnp.float32),
        grid=(Rpad // tm,),
        in_specs=[
            pl.BlockSpec((tm, Cin), lambda i: (i, 0)),
            pl.BlockSpec((Cin, Cpad), lambda i: (0, 0)),
            pl.BlockSpec((1, Cpad), lambda i: (0, 0)),
        ],
        out_specs=pl.BlockSpec((tm, Cpad), lambda i: (i, 0)),
        compiler_params=pltpu.CompilerParams(
            dimension_semantics=("parallel",),
            vmem_limit_bytes=_VMEM_LIMIT,
        ),
    )(xp, wt, bp)
    return out[:R, :Cout]


# ----------------------------------------------------------------------------
# Kernel 2: GRU over the metapath sequence (final hidden state) with a fused
# attention-score + LeakyReLU epilogue.  PyTorch gate order (r, z, n).
# Gridded over edges (independent sequences), "parallel".
# ----------------------------------------------------------------------------
def _gru_kernel(x_ref, wih_t_ref, whh_t_ref, bih_ref, bhh_ref, attn_mat_ref,
                h_ref, s_ref, *, num_edges, alpha):
    L, tE, D = x_ref.shape
    Hh = whh_t_ref.shape[0]

    wih_t = wih_t_ref[...].astype(jnp.bfloat16)      # (D, 3*Hh)
    whh_t = whh_t_ref[...].astype(jnp.bfloat16)      # (Hh, 3*Hh)
    bih = bih_ref[...]                               # (1, 3*Hh) f32
    bhh = bhh_ref[...]                               # (1, 3*Hh) f32

    # One big input-to-hidden matmul for all timesteps.  The reshape keeps the
    # last (lane) dim -> layout-preserving (no concat copy).
    x_all = x_ref[...].reshape(L * tE, D).astype(jnp.bfloat16)
    gx_all = jnp.dot(x_all, wih_t, preferred_element_type=jnp.float32) + bih

    # Fully unrolled recurrence (L is small & static); only gh is serial.
    # Gate math stays in f32 (no bf16 VPU/EUP on v5e).  Gate slices are
    # lane-aligned when Hh is a multiple of 128 (true for the shapes here).
    h = jnp.zeros((tE, Hh), jnp.float32)
    for t in range(L):
        gx = gx_all[t * tE:(t + 1) * tE]
        gh = jnp.dot(h.astype(jnp.bfloat16), whh_t,
                     preferred_element_type=jnp.float32) + bhh
        r = jax.nn.sigmoid(gx[:, :Hh] + gh[:, :Hh])
        z = jax.nn.sigmoid(gx[:, Hh:2 * Hh] + gh[:, Hh:2 * Hh])
        n = jnp.tanh(gx[:, 2 * Hh:] + r * gh[:, 2 * Hh:])
        h = (1.0 - z) * n + z * h
    h_ref[...] = h

    # Fused attention-score epilogue: (tE, Hh) @ (Hh, H) + LeakyReLU; padded
    # edges are forced to -1e30 so they never win the global max.
    s = jnp.dot(h.astype(jnp.bfloat16),
                attn_mat_ref[...].astype(jnp.bfloat16),
                preferred_element_type=jnp.float32)          # (tE, H)
    s = jnp.where(s > 0, s, alpha * s)
    H = s.shape[1]
    row = (pl.program_id(0) * tE
           + jax.lax.broadcasted_iota(jnp.int32, (tE, H), 0))
    s_ref[...] = jnp.where(row < num_edges, s, -1e30)


def gru_hidden_scores(x_led, w_ih, w_hh, b_ih, b_hh, attn_hd, *, num_edges,
                      alpha, tile_e):
    # x_led: (L, E_pad, D) (already padded to a multiple of tile_e)
    L, E_pad, D = x_led.shape
    Hh = w_hh.shape[1]
    H = attn_hd.shape[0]
    # attn as a (Hh, H) block-diagonal matrix: attn_mat[h*D+d, h] = attn[h, d]
    attn_mat = (attn_hd[:, :, None]
                * jnp.eye(H, dtype=jnp.float32)[:, None, :]).reshape(Hh, H)

    tE = tile_e
    kern = functools.partial(_gru_kernel, num_edges=num_edges, alpha=alpha)
    return pl.pallas_call(
        kern,
        out_shape=(jax.ShapeDtypeStruct((E_pad, Hh), jnp.float32),
                   jax.ShapeDtypeStruct((E_pad, H), jnp.float32)),
        grid=(E_pad // tE,),
        in_specs=[
            pl.BlockSpec((L, tE, D), lambda i: (0, i, 0)),
            pl.BlockSpec((D, 3 * Hh), lambda i: (0, 0)),
            pl.BlockSpec((Hh, 3 * Hh), lambda i: (0, 0)),
            pl.BlockSpec((1, 3 * Hh), lambda i: (0, 0)),
            pl.BlockSpec((1, 3 * Hh), lambda i: (0, 0)),
            pl.BlockSpec((Hh, H), lambda i: (0, 0)),
        ],
        out_specs=(pl.BlockSpec((tE, Hh), lambda i: (i, 0)),
                   pl.BlockSpec((tE, H), lambda i: (i, 0))),
        compiler_params=pltpu.CompilerParams(
            dimension_semantics=("parallel",),
            vmem_limit_bytes=_VMEM_LIMIT,
        ),
    )(x_led, w_ih.T, w_hh.T, b_ih.reshape(1, -1), b_hh.reshape(1, -1),
      attn_mat)


# ----------------------------------------------------------------------------
# Kernel 3a: edge-side softmax weights, computed ONCE per metapath (hoisted
# out of the node-tile loop).  Emits a lane-dense (E_pad, 2*Hh) bf16 slab
# [ p_full * hidden | p_full ] used by the fused num/denom aggregation matmul.
# ----------------------------------------------------------------------------
def _edge_weight_kernel(hidden_ref, s_ref, m_ref, expand_ref, out_ref):
    hidden = hidden_ref[...]                                  # (tE, Hh) f32
    p = jnp.exp(s_ref[...] - m_ref[...])                      # (tE, H) f32
    # broadcast per-head weights across their D lanes via the MXU
    p_full = jnp.dot(p.astype(jnp.bfloat16),
                     expand_ref[...].astype(jnp.bfloat16),
                     preferred_element_type=jnp.float32)      # (tE, Hh)
    weighted = p_full * hidden
    out_ref[...] = jnp.concatenate([weighted, p_full],
                                   axis=-1).astype(jnp.bfloat16)


def edge_softmax_weights(hidden, scores, m, num_heads, out_dim, *, tile_e):
    E_pad, Hh = hidden.shape
    H, D = num_heads, out_dim
    expand = jnp.repeat(jnp.eye(H, dtype=jnp.float32), D, axis=1)  # (H, Hh)
    tE = tile_e
    return pl.pallas_call(
        _edge_weight_kernel,
        out_shape=jax.ShapeDtypeStruct((E_pad, 2 * Hh), jnp.bfloat16),
        grid=(E_pad // tE,),
        in_specs=[
            pl.BlockSpec((tE, Hh), lambda i: (i, 0)),
            pl.BlockSpec((tE, H), lambda i: (i, 0)),
            pl.BlockSpec((1, H), lambda i: (0, 0)),
            pl.BlockSpec((H, Hh), lambda i: (0, 0)),
        ],
        out_specs=pl.BlockSpec((tE, 2 * Hh), lambda i: (i, 0)),
        compiler_params=pltpu.CompilerParams(
            dimension_semantics=("parallel",),
            vmem_limit_bytes=_VMEM_LIMIT,
        ),
    )(hidden, scores, m, expand)


# ----------------------------------------------------------------------------
# Kernel 3b: per-destination aggregation.  Single (tN, tE) @ (tE, 2*Hh) MXU
# matmul per grid point (num and denom fused), edge-tiled reduction axis
# ("arbitrary") with an f32 VMEM accumulator; finalize (divide + guard) at the
# last edge tile.
# TODO(synk): replace the dense 0/1 mask matmul with a sorted-by-destination
# segment-sum formulation (scalar-prefetched per-node edge offsets) for very
# large graphs, eliminating the ~N x FLOP blowup entirely.
# ----------------------------------------------------------------------------
def _aggregate_kernel(mask_ref, comb_ref, out_ref, acc_ref):
    @pl.when(pl.program_id(1) == 0)
    def _():
        acc_ref[...] = jnp.zeros_like(acc_ref)

    acc_ref[...] += jnp.dot(mask_ref[...], comb_ref[...],
                            preferred_element_type=jnp.float32)

    @pl.when(pl.program_id(1) == pl.num_programs(1) - 1)
    def _():
        Hh = out_ref.shape[1]
        num = acc_ref[:, :Hh]
        denom = acc_ref[:, Hh:]
        has_edge = denom > 0.0
        safe = jnp.where(has_edge, denom, 1.0)
        out_ref[...] = jnp.where(has_edge, num / safe, 0.0)


def aggregate_by_dst(combined, dst_pad, num_nodes, Hh, *, tile_n, tile_e):
    # combined: (E1, 2*Hh) bf16; dst_pad: (E1,) int32 (padded edges = -1)
    E1 = combined.shape[0]
    two_hh = combined.shape[1]
    N = int(num_nodes)

    tN, N_pad = _tile_and_pad(N, tile_n)
    tEa, E_pad = _lane_tile_and_pad(E1, tile_e)
    if E_pad != E1:
        combined = jnp.pad(combined, ((0, E_pad - E1), (0, 0)))
        dst_pad = jnp.pad(dst_pad, (0, E_pad - E1), constant_values=-1)

    mask = (jnp.arange(N_pad, dtype=jnp.int32)[:, None]
            == dst_pad[None, :]).astype(jnp.bfloat16)          # (N_pad, E_pad)

    out = pl.pallas_call(
        _aggregate_kernel,
        out_shape=jax.ShapeDtypeStruct((N_pad, Hh), jnp.float32),
        grid=(N_pad // tN, E_pad // tEa),
        in_specs=[
            pl.BlockSpec((tN, tEa), lambda i, k: (i, k)),
            pl.BlockSpec((tEa, two_hh), lambda i, k: (k, 0)),
        ],
        out_specs=pl.BlockSpec((tN, Hh), lambda i, k: (i, 0)),
        scratch_shapes=[pltpu.VMEM((tN, two_hh), jnp.float32)],
        compiler_params=pltpu.CompilerParams(
            dimension_semantics=("parallel", "arbitrary"),
            vmem_limit_bytes=_VMEM_LIMIT,
        ),
    )(mask, combined)
    return out[:N]


# ----------------------------------------------------------------------------
# Kernel 4a: ELU + fc1/tanh score accumulation, gridded over target-node tiles
# ("arbitrary", accumulator output).  ELU computed once on the whole block.
# Kernel 4b: weighted sum over metapaths, gridded over target tiles, parallel.
# ----------------------------------------------------------------------------
def _combine_elu_score_kernel(outs_ref, w1t_ref, b1_ref, elu_ref, ssum_ref, *,
                              num_rows):
    M, tT, HD = outs_ref.shape
    A = w1t_ref.shape[1]

    @pl.when(pl.program_id(0) == 0)
    def _():
        ssum_ref[...] = jnp.zeros_like(ssum_ref)

    x = outs_ref[...]
    elu = jnp.where(x > 0, x, jnp.exp(x) - 1.0)
    elu_ref[...] = elu

    flat = elu.reshape(M * tT, HD)                    # layout-preserving
    fc1 = jnp.tanh(
        jnp.dot(flat.astype(jnp.bfloat16), w1t_ref[...].astype(jnp.bfloat16),
                preferred_element_type=jnp.float32) + b1_ref[...]
    )                                                 # (M*tT, A)

    # mask out padded target rows before the per-metapath sums
    valid = (pl.program_id(0) * tT
             + jax.lax.broadcasted_iota(jnp.int32, (tT, A), 0)) < num_rows
    for m in range(M):
        seg = jnp.where(valid, fc1[m * tT:(m + 1) * tT], 0.0)
        ssum_ref[m:m + 1, :] += jnp.sum(seg, axis=0, keepdims=True)


def _combine_sum_kernel(elu_ref, beta_ref, out_ref):
    M, tT, HD = elu_ref.shape
    acc = jnp.zeros((tT, HD), jnp.float32)
    for m in range(M):
        acc = acc + beta_ref[m:m + 1, :] * elu_ref[m]
    out_ref[...] = acc


def combine_metapaths(outs, fc1_w, fc1_b, fc2_w, *, tile_t=256):
    # outs: (M, T, HD); fc1_w: (A, HD); fc1_b: (A,); fc2_w: (1, A)
    M, T, HD = outs.shape
    A = fc1_w.shape[0]
    tT, T_pad = _tile_and_pad(T, tile_t)
    outs_p = outs if T_pad == T else jnp.pad(outs,
                                             ((0, 0), (0, T_pad - T), (0, 0)))

    elu, ssum = pl.pallas_call(
        functools.partial(_combine_elu_score_kernel, num_rows=T),
        out_shape=(jax.ShapeDtypeStruct((M, T_pad, HD), jnp.float32),
                   jax.ShapeDtypeStruct((M, A), jnp.float32)),
        grid=(T_pad // tT,),
        in_specs=[
            pl.BlockSpec((M, tT, HD), lambda i: (0, i, 0)),
            pl.BlockSpec((HD, A), lambda i: (0, 0)),
            pl.BlockSpec((1, A), lambda i: (0, 0)),
        ],
        out_specs=(pl.BlockSpec((M, tT, HD), lambda i: (0, i, 0)),
                   pl.BlockSpec((M, A), lambda i: (0, 0))),
        compiler_params=pltpu.CompilerParams(
            dimension_semantics=("arbitrary",),
            vmem_limit_bytes=_VMEM_LIMIT,
        ),
    )(outs_p, fc1_w.T, fc1_b.reshape(1, -1))

    # tiny (M,) softmax over metapaths: JAX glue
    mean = ssum / jnp.float32(T)                      # (M, A)
    scores = mean @ fc2_w.T                           # (M, 1)
    beta = jax.nn.softmax(scores, axis=0)             # (M, 1)

    h = pl.pallas_call(
        _combine_sum_kernel,
        out_shape=jax.ShapeDtypeStruct((T_pad, HD), jnp.float32),
        grid=(T_pad // tT,),
        in_specs=[
            pl.BlockSpec((M, tT, HD), lambda i: (0, i, 0)),
            pl.BlockSpec((M, 1), lambda i: (0, 0)),
        ],
        out_specs=pl.BlockSpec((tT, HD), lambda i: (i, 0)),
        compiler_params=pltpu.CompilerParams(
            dimension_semantics=("parallel",),
            vmem_limit_bytes=_VMEM_LIMIT,
        ),
    )(elu, beta)
    return h[:T]


# ----------------------------------------------------------------------------
# Full MAGNN_nc_mb forward (minibatch, rnn_type='gru', attn_switch=False)
# ----------------------------------------------------------------------------
def magnn_nc_mb_forward(params, features_list, type_mask_np, edge_dst_list,
                        num_nodes_list, edge_metapath_indices_list,
                        target_idx_list, gru_tile_e=256, attn_tile_n=256,
                        agg_tile_e=512, combine_tile_t=256):
    hidden_dim = params['fc_list'][0]['w'].shape[0]
    num_heads = params['num_heads']
    Hh = num_heads * hidden_dim
    Ntotal = type_mask_np.shape[0]

    # ---- per-type linear feature transform (lane-dense Pallas matmul) ----
    transformed = jnp.zeros((Ntotal, hidden_dim), jnp.float32)
    for i, p in enumerate(params['fc_list']):
        idx_np = np.where(type_mask_np == i)[0]
        tf = linear(features_list[i], p['w'], p['b'])
        transformed = transformed.at[idx_np].set(tf)
    # feat_drop: eval-mode identity
    # TODO(synk): on v7x optionally fold W_ih into this projection (gather the
    # lane-dense (Ntotal, 3*Hh) gx instead of the 32-wide features).

    metapath_outs = []
    for p in range(params['num_metapaths']):
        mp = params['metapath'][p]
        idx = edge_metapath_indices_list[p]               # (E, L)
        E, L = idx.shape
        tE, E_pad = _tile_and_pad(E, gru_tile_e)
        idx_pad = idx if E_pad == E else jnp.pad(idx, ((0, E_pad - E), (0, 0)))
        # TODO(synk): fuse this gather into the GRU kernel via
        # PrefetchScalarGridSpec row-gather (trailing axis is only D lanes).
        x_led = transformed[idx_pad.T]                    # (L, E_pad, D)

        # GRU -> final hidden (E_pad, Hh) + fused LeakyReLU scores (E_pad, H)
        hidden, scores = gru_hidden_scores(
            x_led, mp['w_ih'], mp['w_hh'], mp['b_ih'], mp['b_hh'],
            mp['attn'], num_edges=E, alpha=0.01, tile_e=tE)

        # Global per-head shift (cheap (E_pad, H) reduction; padded rows are
        # -1e30 and never win).  Shared by numerator & denominator, so it
        # cancels in the per-node softmax.
        # TODO(synk): per-destination segmented max if score ranges get wide
        # enough for exp underflow.
        m = jnp.max(scores, axis=0, keepdims=True)        # (1, H)

        combined = edge_softmax_weights(hidden, scores, m, num_heads,
                                        hidden_dim, tile_e=tE)

        dst_pad = jnp.pad(edge_dst_list[p].astype(jnp.int32),
                          (0, E_pad - E), constant_values=-1)
        out_nh = aggregate_by_dst(combined, dst_pad, num_nodes_list[p], Hh,
                                  tile_n=attn_tile_n, tile_e=agg_tile_e)

        metapath_outs.append(out_nh[target_idx_list[p]])  # (T, Hh)

    outs = jnp.stack(metapath_outs, axis=0)               # (M, T, Hh)
    h = combine_metapaths(outs, params['fc1_w'], params['fc1_b'],
                          params['fc2_w'], tile_t=combine_tile_t)
    # NOTE: MAGNN_nc_mb returns only h (layer1.fc / h_fc is discarded).
    return h


# ----------------------------------------------------------------------------
if __name__ == "__main__":
    key = jax.random.PRNGKey(0)

    # small, module-consistent shapes
    num_metapaths = 2
    feats_dim_list = [16, 24]
    nodes_per_type = [16, 16]
    hidden_dim = 32          # = out_dim of metapath layers (in_dim of layer1)
    num_heads = 4            # -> H*D = 128 (lane-aligned gate/head blocks)
    attn_vec_dim = 16
    L = 3                    # metapath length (node indices per edge)
    E = 160                  # edges per metapath graph
    N = 16                   # nodes per metapath graph
    T = 24                   # target nodes per metapath

    Ntotal = sum(nodes_per_type)
    type_mask = np.concatenate(
        [np.full(n, i, dtype=np.int32) for i, n in enumerate(nodes_per_type)]
    )

    keys = iter(jax.random.split(key, 64))

    features_list = [
        jax.random.normal(next(keys), (nodes_per_type[i], feats_dim_list[i]),
                          jnp.float32)
        for i in range(len(feats_dim_list))
    ]

    def init(shape, scale=0.1):
        return scale * jax.random.normal(next(keys), shape, dtype=jnp.float32)

    Hh = num_heads * hidden_dim
    params = {
        'num_metapaths': num_metapaths,
        'num_heads': num_heads,
        'fc_list': [
            {'w': init((hidden_dim, feats_dim_list[i])),
             'b': init((hidden_dim,))}
            for i in range(len(feats_dim_list))
        ],
        'metapath': [],
        'fc1_w': init((attn_vec_dim, Hh)),
        'fc1_b': init((attn_vec_dim,)),
        'fc2_w': init((1, attn_vec_dim)),
    }
    for _ in range(num_metapaths):
        params['metapath'].append({
            'w_ih': init((3 * Hh, hidden_dim)),
            'w_hh': init((3 * Hh, Hh)),
            'b_ih': init((3 * Hh,)),
            'b_hh': init((3 * Hh,)),
            'attn': init((num_heads, hidden_dim)),   # original shape (1,H,D)
        })

    edge_metapath_indices_list = []
    edge_dst_list = []
    target_idx_list = []
    num_nodes_list = []
    for _ in range(num_metapaths):
        idx = jax.random.randint(next(keys), (E, L), 0, Ntotal,
                                 dtype=jnp.int32)
        dst = jnp.arange(E, dtype=jnp.int32) % N   # each node gets >=1 edge
        tgt = jax.random.randint(next(keys), (T,), 0, N, dtype=jnp.int32)
        edge_metapath_indices_list.append(idx)
        edge_dst_list.append(dst)
        target_idx_list.append(tgt)
        num_nodes_list.append(N)

    h = magnn_nc_mb_forward(
        params, features_list, type_mask, edge_dst_list, num_nodes_list,
        edge_metapath_indices_list, target_idx_list,
        gru_tile_e=64,      # E=160 -> pad 192, 3 GRU / edge-weight grid steps
        attn_tile_n=8,      # N=16  -> 2 node tiles
        agg_tile_e=128,     # E_pad -> 256, 2 accumulating edge tiles
        combine_tile_t=16)  # T=24  -> pad 32, 2 target tiles (mask exercised)
    h = jax.block_until_ready(h)
    assert h.shape == (T, num_heads * hidden_dim)
    assert bool(jnp.all(jnp.isfinite(h)))
    print("KERNEL_OK")
</pallas_src>

<mosaic_0001>
module attributes {stable_mosaic.version = 11 : i64} {
  func.func @_linear_kernel(%arg0: i32, %arg1: memref<16x16xf32, #tpu.memory_space<vmem>>, %arg2: memref<16x128xf32, #tpu.memory_space<vmem>>, %arg3: memref<1x128xf32, #tpu.memory_space<vmem>>, %arg4: memref<16x128xf32, #tpu.memory_space<vmem>>) attributes {dimension_semantics = [#tpu.dimension_semantics<parallel>], iteration_bounds = array<i64: 1>, scalar_prefetch = 0 : i64, scratch_operands = 0 : i64, tpu.core_type = #tpu.core_type<tc>, window_params = [{transform_indices = @transform_0, window_bounds = array<i64: 16, 16>}, {pipeline_mode = #tpu.pipeline_mode<synchronous>, transform_indices = @transform_1, window_bounds = array<i64: 16, 128>}, {pipeline_mode = #tpu.pipeline_mode<synchronous>, transform_indices = @transform_2, window_bounds = array<i64: 1, 128>}, {transform_indices = @transform_3, window_bounds = array<i64: 16, 128>}]} {
    %c0 = arith.constant 0 : index
    %c0_0 = arith.constant 0 : index
    %0 = vector.load %arg1[%c0, %c0_0] : memref<16x16xf32, #tpu.memory_space<vmem>>, vector<16x16xf32>
    %1 = arith.truncf %0 : vector<16x16xf32> to vector<16x16xbf16>
    %c0_1 = arith.constant 0 : index
    %c0_2 = arith.constant 0 : index
    %2 = vector.load %arg2[%c0_1, %c0_2] : memref<16x128xf32, #tpu.memory_space<vmem>>, vector<16x128xf32>
    %3 = arith.truncf %2 : vector<16x128xf32> to vector<16x128xbf16>
    %cst = arith.constant dense<0.000000e+00> : vector<16x128xf32>
    %4 = tpu.matmul %1, %3, %cst {dimension_numbers = #tpu.dot_dimension_numbers<[1], [0], [0], [1], [0, 0, 1, 1], [], []>} : vector<16x16xbf16>, vector<16x128xbf16>, vector<16x128xf32> -> vector<16x128xf32>
    %c0_3 = arith.constant 0 : index
    %c0_4 = arith.constant 0 : index
    %5 = vector.load %arg3[%c0_3, %c0_4] : memref<1x128xf32, #tpu.memory_space<vmem>>, vector<1x128xf32>
    %6 = vector.broadcast %5 : vector<1x128xf32> to vector<16x128xf32>
    %7 = arith.addf %4, %6 : vector<16x128xf32>
    %c0_5 = arith.constant 0 : index
    %c0_6 = arith.constant 0 : index
    %8 = vector.load %arg4[%c0_5, %c0_6] : memref<16x128xf32, #tpu.memory_space<vmem>>, vector<16x128xf32>
    tpu.vector_store %arg4[%c0_5, %c0_6], %7 {strides = array<i32>} : memref<16x128xf32, #tpu.memory_space<vmem>>, vector<16x128xf32>,
    return
  }
  func.func @transform_0(%arg0: i32) -> (i32, i32) {
    %c0_i32 = arith.constant 0 : i32
    %c0_i32_0 = arith.constant 0 : i32
    return %arg0, %c0_i32 : i32, i32
  }
  func.func @transform_1(%arg0: i32) -> (i32, i32) {
    %c0_i32 = arith.constant 0 : i32
    %c0_i32_0 = arith.constant 0 : i32
    %c0_i32_1 = arith.constant 0 : i32
    return %c0_i32, %c0_i32_0 : i32, i32
  }
  func.func @transform_2(%arg0: i32) -> (i32, i32) {
    %c0_i32 = arith.constant 0 : i32
    %c0_i32_0 = arith.constant 0 : i32
    %c0_i32_1 = arith.constant 0 : i32
    return %c0_i32, %c0_i32_0 : i32, i32
  }
  func.func @transform_3(%arg0: i32) -> (i32, i32) {
    %c0_i32 = arith.constant 0 : i32
    %c0_i32_0 = arith.constant 0 : i32
    return %arg0, %c0_i32 : i32, i32
  }
}

</mosaic_0001>

<llo_original>
// kernel: tpu_custom_call.1
$region0: #{tpu_custom_call.1}
  #allocation0 [shape = 'u32[]', space=smem, size = 0x4, offset = 0x4, fixed_abs, tag = 'smem constant byte address 0x4 - core index']
  #allocation1 [shape = 'u32[144,128]{1,0:T(1,128)}', space=vmem, size = 0x12000, scoped, tag = 'internal scratch']
  %s0 = inlined_call_operand.hbm [shape: f32[16,16], index: 0, kind: input, shape index: {}]
  %s1 = inlined_call_operand.hbm [shape: f32[16,128], index: 1, kind: input, shape index: {}]
  %s2 = inlined_call_operand.vmem [shape: f32[1,128], index: 2, kind: input, shape index: {}]
  %s3 = inlined_call_operand.hbm [shape: f32[16,128], index: 3, kind: output, shape index: {}]
  %s4 = sld [smem:[#allocation0]]
  $region30: #{tpu_custom_call.1} parent=0
    _
  %s6 = ssub.s32 1, %s4
  %s7 = scalar_select 0, %s6, %s4
  $region1: #{tpu_custom_call.1} parent=0
    #allocation2 [shape = 'u8[8192]{0}', space=vmem, size = 0x2000, scoped, tag = 'input window, operand 0, single buffered']
    #allocation3 [shape = 's32[1]{0}', space=sflag, size = 0x4, scoped, tag = 'scoped memory for tpu_custom_call.1']
    #allocation4 [shape = 's32[1]{0}', space=sflag, size = 0x4, scoped, tag = 'scoped memory for tpu_custom_call.1']
    #allocation5 [shape = 'u8[8192]{0}', space=vmem, size = 0x2000, scoped, tag = 'input window, operand 1, single buffered']
    #allocation6 [shape = 's32[1]{0}', space=sflag, size = 0x4, scoped, tag = 'scoped memory for tpu_custom_call.1']
    #allocation7 [shape = 'u8[8192]{0}', space=vmem, size = 0x2000, scoped, tag = 'output window, operand 0, single buffered']
    %8 = vsyncpa [#allocation3], 0
    %9 = vsyncpa [#allocation6], 0
    %10 = vsyncpa [#allocation4], 0
    // Predicated region
    $region2: #{tpu_custom_call.1} parent=1 // pred_check
      _
    $region3: #{tpu_custom_call.1} parent=1 // pred_check_branch
      %12 = sbr.rel (0) target = $region5
    $region4: #{tpu_custom_call.1} parent=1 // pred_region
      %s14 = ssub.s32 256, 256
      %15 = vsyncadd [#allocation3], %s14
      %s16 = sshll.u32 [#allocation2], 4
      %s17 = int_to_ptr.vmem [resolvable:$true] %s16
      %22 = dma.hbm_to_vmem [thread:$0]  %s0, 256, %s17, [#allocation3], 128, 128, 8
    $region5: #{tpu_custom_call.1} parent=1 // pred_fallthru
      _
    // Predicated region
    $region6: #{tpu_custom_call.1} parent=1 // pred_check
      _
    $region7: #{tpu_custom_call.1} parent=1 // pred_check_branch
      %24 = sbr.rel (0) target = $region9
    $region8: #{tpu_custom_call.1} parent=1 // pred_region
      %s26 = ssub.s32 256, 256
      %27 = vsyncadd [#allocation6], %s26
      %s28 = sshll.u32 [#allocation5], 4
      %s29 = int_to_ptr.vmem [resolvable:$true] %s28
      %34 = dma.hbm_to_vmem [thread:$0]  %s1, 256, %s29, [#allocation6], 128, 128, 8
    $region9: #{tpu_custom_call.1} parent=1 // pred_fallthru
      _
    // Predicated region
    $region10: #{tpu_custom_call.1} parent=1 // pred_check
      _
    $region11: #{tpu_custom_call.1} parent=1 // pred_check_branch
      %36 = sbr.rel (0) target = $region13
    $region12: #{tpu_custom_call.1} parent=1 // pred_region
      _
    $region13: #{tpu_custom_call.1} parent=1 // pred_fallthru
      _
    // Predicated region
    $region14: #{tpu_custom_call.1} parent=1 // pred_check
      _
    $region15: #{tpu_custom_call.1} parent=1 // pred_check_branch
      %38 = sbr.rel (0) target = $region17
    $region16: #{tpu_custom_call.1} parent=1 // pred_region
      %39 = dma.done [#allocation3], 256
    $region17: #{tpu_custom_call.1} parent=1 // pred_fallthru
      _
    // Predicated region
    $region18: #{tpu_custom_call.1} parent=1 // pred_check
      _
    $region19: #{tpu_custom_call.1} parent=1 // pred_check_branch
      %41 = sbr.rel (0) target = $region21
    $region20: #{tpu_custom_call.1} parent=1 // pred_region
      %42 = dma.done [#allocation6], 256
    $region21: #{tpu_custom_call.1} parent=1 // pred_fallthru
      _
    %v44 = vld [vmem:[#allocation2] sm:$0xff]
    %v45 = vld [vmem:[#allocation2 + $0x8] sm:$0xff]
    %v46 = vpack.c.bf16 %v45, %v44
    %v47 = vld [vmem:[#allocation5] sm:$0xff]
    %v48 = vld [vmem:[#allocation5 + $0x8] sm:$0xff]
    %v49 = vpack.c.bf16 %v48, %v47
    %v50 = vld [vmem:[%s2] sm:$0x1]
    %v52 = vlaneseq
    %v53 = vshrl.u32 %v52, 7
    %v54 = vsub.s32 0, %v53
    %v55 = vrot.slane %v50, %v54
    %vm57 = vcmask 130048
    %v59 = vsel %vm57, %v46, 0
    %61 = vmatprep.subr.bf16.mxu0 0
    %62 = vmatpush1.bf16.msra.mxu0 %v49
    %63 = vmatprep.subr.bf16.mxu0 0
    %64 = vmatpush1.bf16.msra.mxu0 0
    %65 = vmatprep.subr.bf16.mxu0 0
    %66 = vmatpush1.bf16.msra.mxu0 0
    %67 = vmatprep.subr.bf16.mxu0 0
    %68 = vmatpush1.bf16.msra.mxu0 0
    %69 = vmatprep.subr.bf16.mxu0 0
    %70 = vmatpush1.bf16.msra.mxu0 0
    %71 = vmatprep.subr.bf16.mxu0 0
    %72 = vmatpush1.bf16.msra.mxu0 0
    %73 = vmatprep.subr.bf16.mxu0 0
    %74 = vmatpush1.bf16.msra.mxu0 0
    %75 = vmatprep.subr.bf16.mxu0 0
    %76 = vmatpush1.bf16.msra.mxu0 0
    %77 = vmatprep.subr.bf16.mxu0 0
    %78 = vmatpush1.bf16.msra.mxu0 0
    %79 = vmatprep.subr.bf16.mxu0 0
    %80 = vmatpush1.bf16.msra.mxu0 0
    %81 = vmatprep.subr.bf16.mxu0 0
    %82 = vmatpush1.bf16.msra.mxu0 0
    %83 = vmatprep.subr.bf16.mxu0 0
    %84 = vmatpush1.bf16.msra.mxu0 0
    %85 = vmatprep.subr.bf16.mxu0 0
    %86 = vmatpush1.bf16.msra.mxu0 0
    %87 = vmatprep.subr.bf16.mxu0 0
    %88 = vmatpush1.bf16.msra.mxu0 0
    %89 = vmatprep.subr.bf16.mxu0 0
    %90 = vmatpush1.bf16.msra.mxu0 0
    %91 = vmatprep.subr.bf16.mxu0 0
    %92 = vmatpush1.bf16.msra.mxu0 0
    %93 = vmatprep.mubr.bf16.mxu0 0
    %94 = vmatmul.mubr.bf16.gmra.mrb[0].mxu0 %v59
    %v95 = vpop.f32.mrb[0].mxu0
    %v96 = vadd.f32 %v55, %v95
    %v97 = vpop.f32.mrb[0].mxu0
    %v98 = vpop.f32.mrb[0].mxu0
    %v99 = vadd.f32 %v55, %v98
    %v100 = vpop.f32.mrb[0].mxu0
    %101 = vdwg.mxu0
    %102 = vst [vmem:[#allocation7] sm:$0xff] %v96
    %103 = vst [vmem:[#allocation7 + $0x8] sm:$0xff] %v99
    // Predicated region
    $region22: #{tpu_custom_call.1} parent=1 // pred_check
      _
    $region23: #{tpu_custom_call.1} parent=1 // pred_check_branch
      %105 = sbr.rel (0) target = $region25
    $region24: #{tpu_custom_call.1} parent=1 // pred_region
      %s107 = ssub.s32 256, 256
      %108 = vsyncadd [#allocation4], %s107
      %s109 = sshll.u32 [#allocation7], 4
      %s110 = int_to_ptr.vmem [resolvable:$true] %s109
      %115 = dma.vmem_to_hbm [thread:$0]  %s110, 256, %s3, [#allocation4], 128, 128, 8
    $region25: #{tpu_custom_call.1} parent=1 // pred_fallthru
      _
    // Predicated region
    $region26: #{tpu_custom_call.1} parent=1 // pred_check
      _
    $region27: #{tpu_custom_call.1} parent=1 // pred_check_branch
      %117 = sbr.rel (0) target = $region29
    $region28: #{tpu_custom_call.1} parent=1 // pred_region
      %118 = dma.done [#allocation4], 256
    $region29: #{tpu_custom_call.1} parent=1 // pred_fallthru
      _
    %119 = vsyncpa [#allocation3], 1
    %120 = vsyncpa [#allocation6], 1
    %121 = vsyncpa [#allocation4], 1

</llo_original>
